<compile_context>
chip_gen: v7x
topology: tpu7x:2x2x1
jax: 0.10.0
libtpu: 0.0.40
codegen_flags: <defaults>
</compile_context>

<pallas_src>
import functools

import jax
import jax.numpy as jnp
from jax.experimental import pallas as pl
from jax.experimental.pallas import tpu as pltpu


def _round_up(x, m):
    return (x + m - 1) // m * m


def _device_kind():
    try:
        return jax.devices()[0].device_kind.lower()
    except Exception:
        return ""


def _hw_params(kind):
    """(vmem_limit_bytes, vmem_budget_bytes, tiled (tm,tn,tk), tm_resident_max)."""
    if "v7" in kind:
        # 64 MiB physical per TC: raise the 32 MiB scoped default, keep headroom.
        return 48 << 20, 36 << 20, (512, 512, 512), 512
    if "v6" in kind:
        # 128 MiB physical: big, lane-dense tiles amortize grid-step overhead.
        return 80 << 20, 56 << 20, (512, 1024, 512), 512
    if "v5" in kind:
        # 128 MiB physical, weakest epilogue resources: longer M tiles.
        return 64 << 20, 44 << 20, (512, 256, 512), 512
    # Unknown device: conservative.
    return 48 << 20, 32 << 20, (256, 256, 512), 512


# --------------------------------------------------------------------------
# Kernels
# --------------------------------------------------------------------------

def _resident_kernel(x_ref, w_ref, b_ref, o_ref, *, compute_dtype):
    # x_ref: (tm, K)  w_ref: (K, Np) VMEM-resident  b_ref: (1, Np)  o_ref: (tm, Np)
    x = x_ref[...]
    if compute_dtype is not None and x.dtype != compute_dtype:
        x = x.astype(compute_dtype)          # per-tile VPU cast, hidden under MXU
    acc = jnp.dot(x, w_ref[...], preferred_element_type=jnp.float32)
    o_ref[...] = (acc + b_ref[...].astype(jnp.float32)).astype(o_ref.dtype)


def _tiled_kernel_f32out(x_ref, w_ref, b_ref, o_ref, *, compute_dtype):
    # f32 output: the output block is resident across K (index_map ignores k),
    # so accumulate straight into it — no scratch, no extra writeback pass.
    k = pl.program_id(2)

    @pl.when(k == 0)
    def _init():
        o_ref[...] = jnp.broadcast_to(
            b_ref[...].astype(jnp.float32), o_ref.shape)

    x = x_ref[...]
    if compute_dtype is not None and x.dtype != compute_dtype:
        x = x.astype(compute_dtype)
    o_ref[...] += jnp.dot(x, w_ref[...], preferred_element_type=jnp.float32)


def _tiled_kernel_scratch(x_ref, w_ref, b_ref, o_ref, acc_ref, *, compute_dtype):
    # Non-f32 output: keep an f32 VMEM accumulator, cast once at the end.
    k = pl.program_id(2)

    @pl.when(k == 0)
    def _init():
        acc_ref[...] = jnp.broadcast_to(
            b_ref[...].astype(jnp.float32), acc_ref.shape)

    x = x_ref[...]
    if compute_dtype is not None and x.dtype != compute_dtype:
        x = x.astype(compute_dtype)
    acc_ref[...] += jnp.dot(x, w_ref[...], preferred_element_type=jnp.float32)

    @pl.when(k == pl.num_programs(2) - 1)
    def _store():
        o_ref[...] = acc_ref[...].astype(o_ref.dtype)


# --------------------------------------------------------------------------
# pallas_call wrappers
# --------------------------------------------------------------------------

def _pallas_linear_resident(x2d, w_prep, b_prep, out_dtype, tm, compute_dtype,
                            vmem_limit):
    """y = x2d @ w_prep + b_prep with the whole weight VMEM-resident."""
    M, K = x2d.shape
    Kw, Np = w_prep.shape
    assert K == Kw
    n_m = pl.cdiv(M, tm)
    Mp = n_m * tm
    if Mp != M:                               # pad only when actually needed
        x2d = jnp.pad(x2d, ((0, Mp - M), (0, 0)))

    flops = 2 * Mp * Np * K
    bytes_accessed = (Mp * K * x2d.dtype.itemsize
                      + K * Np * w_prep.dtype.itemsize
                      + Np * b_prep.dtype.itemsize
                      + Mp * Np * jnp.dtype(out_dtype).itemsize)

    return pl.pallas_call(
        functools.partial(_resident_kernel, compute_dtype=compute_dtype),
        out_shape=jax.ShapeDtypeStruct((Mp, Np), out_dtype),
        grid_spec=pltpu.PrefetchScalarGridSpec(
            num_scalar_prefetch=0,
            grid=(n_m,),
            in_specs=[
                pl.BlockSpec((tm, K), lambda i: (i, 0)),
                # Constant block index -> weight DMA'd once, stays resident.
                pl.BlockSpec((K, Np), lambda i: (0, 0)),
                pl.BlockSpec((1, Np), lambda i: (0, 0)),
            ],
            out_specs=pl.BlockSpec((tm, Np), lambda i: (i, 0)),
        ),
        compiler_params=pltpu.CompilerParams(
            dimension_semantics=("parallel",),
            vmem_limit_bytes=vmem_limit),
        cost_estimate=pl.CostEstimate(
            flops=flops, transcendentals=0, bytes_accessed=bytes_accessed),
    )(x2d, w_prep, b_prep)


def _pallas_linear_tiled(x2d, w_prep, b_prep, out_dtype, tiles, compute_dtype,
                         vmem_limit):
    """Tiled (M, N, K) fallback for weights too large to keep VMEM-resident."""
    M, K = x2d.shape
    Kp, Np = w_prep.shape                     # weight pre-padded at __init__
    tm, tn, tk = tiles
    tm = min(tm, _round_up(M, 8))
    n_m = pl.cdiv(M, tm)
    Mp = n_m * tm
    if (Mp, Kp) != (M, K):
        x2d = jnp.pad(x2d, ((0, Mp - M), (0, Kp - K)))

    grid = (Mp // tm, Np // tn, Kp // tk)

    if jnp.dtype(out_dtype) == jnp.dtype(jnp.float32):
        kernel = functools.partial(_tiled_kernel_f32out,
                                   compute_dtype=compute_dtype)
        scratch_shapes = []
    else:
        kernel = functools.partial(_tiled_kernel_scratch,
                                   compute_dtype=compute_dtype)
        scratch_shapes = [pltpu.VMEM((tm, tn), jnp.float32)]

    flops = 2 * Mp * Np * Kp
    bytes_accessed = (Mp * Kp * x2d.dtype.itemsize
                      + Kp * Np * w_prep.dtype.itemsize
                      + Np * b_prep.dtype.itemsize
                      + Mp * Np * jnp.dtype(out_dtype).itemsize)

    return pl.pallas_call(
        kernel,
        out_shape=jax.ShapeDtypeStruct((Mp, Np), out_dtype),
        grid_spec=pltpu.PrefetchScalarGridSpec(
            num_scalar_prefetch=0,
            grid=grid,
            in_specs=[
                pl.BlockSpec((tm, tk), lambda i, j, k: (i, k)),
                pl.BlockSpec((tk, tn), lambda i, j, k: (k, j)),
                pl.BlockSpec((1, tn), lambda i, j, k: (0, j)),
            ],
            out_specs=pl.BlockSpec((tm, tn), lambda i, j, k: (i, j)),
            scratch_shapes=scratch_shapes,
        ),
        compiler_params=pltpu.CompilerParams(
            dimension_semantics=("parallel", "parallel", "arbitrary"),
            vmem_limit_bytes=vmem_limit),
        cost_estimate=pl.CostEstimate(
            flops=flops, transcendentals=0, bytes_accessed=bytes_accessed),
    )(x2d, w_prep, b_prep)


# --------------------------------------------------------------------------
# Module
# --------------------------------------------------------------------------

class SkipConnectionFC:
    """JAX/Pallas port of the PyTorch SkipConnectionFC module."""

    def __init__(self, in_channels, out_channels, key=None, dtype=jnp.float32,
                 compute_dtype="auto", tiles=None, force_tiled=False):
        self.in_channels = in_channels
        self.out_channels = out_channels
        self.true_skip = out_channels == in_channels

        kind = _device_kind()
        self._is_v7 = "v7" in kind
        (self._vmem_limit, vmem_budget, default_tiles,
         tm_resident_max) = _hw_params(kind)
        self._tiles = tuple(tiles) if tiles is not None else default_tiles

        # bf16 MXU inputs by default on v6e/v7x (f32 accumulate / output in x's
        # dtype); keep f32 elsewhere.  Pass compute_dtype=jnp.float32 to opt out.
        if isinstance(compute_dtype, str) and compute_dtype == "auto":
            cd = (jnp.bfloat16
                  if (("v6" in kind or "v7" in kind)
                      and jnp.dtype(dtype) == jnp.dtype(jnp.float32))
                  else None)
        else:
            cd = compute_dtype
        self._compute_dtype = None if cd is None else jnp.dtype(cd)

        if self.true_skip:
            self.weight_kn = None
            self.bias = None
            return

        if key is None:
            key = jax.random.PRNGKey(0)
        kw, kb = jax.random.split(key)
        # torch.nn.Linear default init: U(-1/sqrt(fan_in), 1/sqrt(fan_in)).
        bound = 1.0 / (in_channels ** 0.5)
        # PyTorch weight is (out, in); store transposed (in, out) for x @ W.
        self.weight_kn = jax.random.uniform(
            kw, (in_channels, out_channels), dtype=dtype,
            minval=-bound, maxval=bound)
        self.bias = jax.random.uniform(
            kb, (out_channels,), dtype=dtype, minval=-bound, maxval=bound)

        # ---- Static kernel-side weight prep: done ONCE, off the hot path. ----
        self._use_kernel = out_channels >= 128
        self._use_resident = False
        self._w_prep = None
        self._b_prep = None
        self._tm_resident = None
        if not self._use_kernel:
            return

        K, N = in_channels, out_channels
        w_dtype = self._compute_dtype if self._compute_dtype is not None \
            else jnp.dtype(dtype)
        w_item = jnp.dtype(w_dtype).itemsize

        # Resident path sizing: whole weight (double-buffer worst case) plus
        # double-buffered f32 x/out tiles must fit the scoped-VMEM budget.
        np_res = _round_up(N, 128)
        w_bytes = 2 * K * np_res * w_item
        per_row = 2 * K * 4 + 2 * np_res * 4
        tm_fit = (vmem_budget - w_bytes) // per_row if vmem_budget > w_bytes else 0
        tm_fit = (int(tm_fit) // 8) * 8

        if not force_tiled and tm_fit >= 64:
            self._use_resident = True
            self._tm_resident = min(tm_resident_max, tm_fit)
            wp = self.weight_kn
            if np_res != N:
                wp = jnp.pad(wp, ((0, 0), (0, np_res - N)))
            self._w_prep = wp.astype(w_dtype)
            self._b_prep = jnp.pad(self.bias.astype(jnp.float32),
                                   (0, np_res - N)).reshape(1, np_res)
        else:
            # Tiled fallback (weight too big for VMEM, or forced in tests):
            # pre-pad to tile multiples so every weight block is full.
            tm, tn, tk = self._tiles
            kp = _round_up(K, tk)
            np_t = _round_up(N, tn)
            wp = jnp.pad(self.weight_kn, ((0, kp - K), (0, np_t - N)))
            self._w_prep = wp.astype(w_dtype)
            self._b_prep = jnp.pad(self.bias.astype(jnp.float32),
                                   (0, np_t - N)).reshape(1, np_t)

    def __call__(self, x):
        if self.true_skip:
            # Identity branch (nn.Sequential()): pure pass-through, no kernel.
            return x

        lead = x.shape[:-1]
        N = self.out_channels
        x2d = x.reshape(-1, self.in_channels)
        M = x2d.shape[0]

        if not self._use_kernel or M < 8:
            # Sub-lane-width output / a handful of rows: launch + DMA overhead
            # and masked partial stores dominate -> let XLA's fused dot win.
            y2d = (x2d @ self.weight_kn + self.bias).astype(x.dtype)
            return y2d.reshape(*lead, N)

        out_dtype = x.dtype
        if self._use_resident:
            tm_cap = self._tm_resident
            if M <= tm_cap:
                if self._is_v7 and M > 256:
                    # Split M so both v7x TensorCores get a block.
                    tm = _round_up(pl.cdiv(M, 2), 8)
                else:
                    tm = M   # single full-dim block: no pad, no (8,) constraint
            else:
                tm = tm_cap
            y2d = _pallas_linear_resident(
                x2d, self._w_prep, self._b_prep, out_dtype, tm,
                self._compute_dtype, self._vmem_limit)
        else:
            y2d = _pallas_linear_tiled(
                x2d, self._w_prep, self._b_prep, out_dtype, self._tiles,
                self._compute_dtype, self._vmem_limit)

        if y2d.shape != (M, N):
            y2d = y2d[:M, :N]
        return y2d.reshape(*lead, N)


def _reference(x, mod):
    x2d = x.reshape(-1, mod.in_channels).astype(jnp.float32)
    y = jnp.dot(x2d, mod.weight_kn,
                precision=jax.lax.Precision.HIGHEST) + mod.bias
    return y.reshape(*x.shape[:-1], mod.out_channels)


if __name__ == "__main__":
    key = jax.random.PRNGKey(0)
    k_x1, k_x2, k_x3, k_p1, k_p2, k_p3 = jax.random.split(key, 6)

    # ---- Case 1: resident-weight path, explicit f32 compute.
    # batch=2, seq=64, in=384, out=256 -> M=128, K=384, N=256.
    batch, seq, in_ch, out_ch = 2, 64, 384, 256
    x = jax.random.normal(k_x1, (batch, seq, in_ch), dtype=jnp.float32)
    mod = SkipConnectionFC(in_ch, out_ch, key=k_p1, compute_dtype=jnp.float32)
    y = mod(x)
    jax.block_until_ready(y)
    y_ref = _reference(x, mod)
    assert y.shape == (batch, seq, out_ch)
    assert jnp.allclose(y, y_ref, atol=2e-3, rtol=2e-3), \
        float(jnp.max(jnp.abs(y - y_ref)))

    # ---- Case 2: device-default compute dtype (bf16 MXU inputs on v6e/v7x).
    mod_auto = SkipConnectionFC(in_ch, out_ch, key=k_p1)
    y_auto = mod_auto(x)
    jax.block_until_ready(y_auto)
    assert jnp.allclose(y_auto, y_ref, atol=3e-2, rtol=3e-2)

    # ---- Case 3: non-aligned shapes (N padded once at init, M=20 single block).
    x_odd = jax.random.normal(k_x2, (2, 10, 100), dtype=jnp.float32)
    mod_odd = SkipConnectionFC(100, 200, key=k_p2, compute_dtype=jnp.float32)
    y_odd = mod_odd(x_odd)
    jax.block_until_ready(y_odd)
    assert y_odd.shape == (2, 10, 200)
    assert jnp.allclose(y_odd, _reference(x_odd, mod_odd), atol=2e-3, rtol=2e-3)

    # ---- Case 4: forced tiled path (3-D grid, accumulate into o_ref),
    # non-tile-multiple K exercises the init-time K padding.
    x_t = jax.random.normal(k_x3, (4, 64, 300), dtype=jnp.float32)
    mod_t = SkipConnectionFC(300, 256, key=k_p3, compute_dtype=jnp.float32,
                             tiles=(128, 128, 128), force_tiled=True)
    y_t = mod_t(x_t)
    jax.block_until_ready(y_t)
    assert y_t.shape == (4, 64, 256)
    assert jnp.allclose(y_t, _reference(x_t, mod_t), atol=2e-3, rtol=2e-3)

    # ---- Case 5: forced tiled path with bf16 activations (scratch-accumulator
    # variant: output dtype != f32).
    x_bf = x_t.astype(jnp.bfloat16)
    y_bf = mod_t(x_bf)
    jax.block_until_ready(y_bf)
    ref_bf = _reference(x_bf, mod_t)
    assert jnp.allclose(y_bf.astype(jnp.float32), ref_bf, atol=8e-2, rtol=8e-2)

    # ---- Case 6: tiny output width (N=64 < 128) -> XLA fallback, no kernel.
    mod_tiny = SkipConnectionFC(in_ch, 64, key=k_p2)
    y_tiny = mod_tiny(x)
    jax.block_until_ready(y_tiny)
    assert y_tiny.shape == (batch, seq, 64)
    assert jnp.allclose(y_tiny, _reference(x, mod_tiny), atol=2e-3, rtol=2e-3)

    # ---- Case 7: out_channels == in_channels -> identity (true_skip).
    mod_id = SkipConnectionFC(in_ch, in_ch)
    y_id = mod_id(x)
    jax.block_until_ready(y_id)
    assert jnp.array_equal(y_id, x)

    print("KERNEL_OK")
</pallas_src>

<mosaic_0001>
module attributes {stable_mosaic.version = 11 : i64} {
  func.func @_resident_kernel(%arg0: i32, %arg1: memref<128x384xf32, #tpu.memory_space<vmem>>, %arg2: memref<384x256xf32, #tpu.memory_space<vmem>>, %arg3: memref<1x256xf32, #tpu.memory_space<vmem>>, %arg4: memref<128x256xf32, #tpu.memory_space<vmem>>) attributes {dimension_semantics = [#tpu.dimension_semantics<parallel>], iteration_bounds = array<i64: 1>, scalar_prefetch = 0 : i64, scratch_operands = 0 : i64, tpu.core_type = #tpu.core_type<tc>, window_params = [{transform_indices = @transform_0, window_bounds = array<i64: 128, 384>}, {pipeline_mode = #tpu.pipeline_mode<synchronous>, transform_indices = @transform_1, window_bounds = array<i64: 384, 256>}, {pipeline_mode = #tpu.pipeline_mode<synchronous>, transform_indices = @transform_2, window_bounds = array<i64: 1, 256>}, {transform_indices = @transform_3, window_bounds = array<i64: 128, 256>}]} {
    %c0 = arith.constant 0 : index
    %c0_0 = arith.constant 0 : index
    %0 = vector.load %arg1[%c0, %c0_0] : memref<128x384xf32, #tpu.memory_space<vmem>>, vector<128x384xf32>
    %c0_1 = arith.constant 0 : index
    %c0_2 = arith.constant 0 : index
    %1 = vector.load %arg2[%c0_1, %c0_2] : memref<384x256xf32, #tpu.memory_space<vmem>>, vector<384x256xf32>
    %cst = arith.constant dense<0.000000e+00> : vector<128x256xf32>
    %2 = tpu.matmul %0, %1, %cst {dimension_numbers = #tpu.dot_dimension_numbers<[1], [0], [0], [1], [0, 0, 1, 1], [], []>} : vector<128x384xf32>, vector<384x256xf32>, vector<128x256xf32> -> vector<128x256xf32>
    %c0_3 = arith.constant 0 : index
    %c0_4 = arith.constant 0 : index
    %3 = vector.load %arg3[%c0_3, %c0_4] : memref<1x256xf32, #tpu.memory_space<vmem>>, vector<1x256xf32>
    %4 = vector.broadcast %3 : vector<1x256xf32> to vector<128x256xf32>
    %5 = arith.addf %2, %4 : vector<128x256xf32>
    %c0_5 = arith.constant 0 : index
    %c0_6 = arith.constant 0 : index
    %6 = vector.load %arg4[%c0_5, %c0_6] : memref<128x256xf32, #tpu.memory_space<vmem>>, vector<128x256xf32>
    tpu.vector_store %arg4[%c0_5, %c0_6], %5 {strides = array<i32>} : memref<128x256xf32, #tpu.memory_space<vmem>>, vector<128x256xf32>,
    return
  }
  func.func @transform_0(%arg0: i32) -> (i32, i32) {
    %c0_i32 = arith.constant 0 : i32
    %c0_i32_0 = arith.constant 0 : i32
    return %arg0, %c0_i32 : i32, i32
  }
  func.func @transform_1(%arg0: i32) -> (i32, i32) {
    %c0_i32 = arith.constant 0 : i32
    %c0_i32_0 = arith.constant 0 : i32
    %c0_i32_1 = arith.constant 0 : i32
    return %c0_i32, %c0_i32_0 : i32, i32
  }
  func.func @transform_2(%arg0: i32) -> (i32, i32) {
    %c0_i32 = arith.constant 0 : i32
    %c0_i32_0 = arith.constant 0 : i32
    %c0_i32_1 = arith.constant 0 : i32
    return %c0_i32, %c0_i32_0 : i32, i32
  }
  func.func @transform_3(%arg0: i32) -> (i32, i32) {
    %c0_i32 = arith.constant 0 : i32
    %c0_i32_0 = arith.constant 0 : i32
    return %arg0, %c0_i32 : i32, i32
  }
}

</mosaic_0001>

<llo_original>
// kernel: tpu_custom_call.1
$region0: #{tpu_custom_call.1}
  #allocation0 [shape = 'u32[]', space=smem, size = 0x4, offset = 0x4, fixed_abs, tag = 'smem constant byte address 0x4 - core index']
  #allocation1 [shape = 'u32[144,128]{1,0:T(1,128)}', space=vmem, size = 0x12000, scoped, tag = 'internal scratch']
  %s0 = inlined_call_operand.hbm [shape: f32[128,384], index: 0, kind: input, shape index: {}]
  %s1 = inlined_call_operand.hbm [shape: f32[384,256], index: 1, kind: input, shape index: {}]
  %s2 = inlined_call_operand.vmem [shape: f32[1,256], index: 2, kind: input, shape index: {}]
  %s3 = inlined_call_operand.hbm [shape: f32[128,256], index: 3, kind: output, shape index: {}]
  %s4 = sld [smem:[#allocation0]]
  $region30: #{tpu_custom_call.1} parent=0
    _
  %s6 = ssub.s32 1, %s4
  %s7 = scalar_select 0, %s6, %s4
  $region1: #{tpu_custom_call.1} parent=0
    #allocation2 [shape = 'u8[196608]{0}', space=vmem, size = 0x30000, scoped, tag = 'input window, operand 0, single buffered']
    #allocation3 [shape = 's32[1]{0}', space=sflag, size = 0x4, scoped, tag = 'scoped memory for tpu_custom_call.1']
    #allocation4 [shape = 's32[1]{0}', space=sflag, size = 0x4, scoped, tag = 'scoped memory for tpu_custom_call.1']
    #allocation5 [shape = 'u8[393216]{0}', space=vmem, size = 0x60000, scoped, tag = 'input window, operand 1, single buffered']
    #allocation6 [shape = 's32[1]{0}', space=sflag, size = 0x4, scoped, tag = 'scoped memory for tpu_custom_call.1']
    #allocation7 [shape = 'u8[131072]{0}', space=vmem, size = 0x20000, scoped, tag = 'output window, operand 0, single buffered']
    %8 = vsyncpa [#allocation3], 0
    %9 = vsyncpa [#allocation6], 0
    %10 = vsyncpa [#allocation4], 0
    // Predicated region
    $region2: #{tpu_custom_call.1} parent=1 // pred_check
      _
    $region3: #{tpu_custom_call.1} parent=1 // pred_check_branch
      %12 = sbr.rel (0) target = $region5
    $region4: #{tpu_custom_call.1} parent=1 // pred_region
      %s14 = ssub.s32 6144, 6144
      %15 = vsyncadd [#allocation3], %s14
      %s16 = sshll.u32 [#allocation2], 4
      %s17 = int_to_ptr.vmem [resolvable:$true] %s16
      %22 = dma.hbm_to_vmem [thread:$0]  %s0, 6144, %s17, [#allocation3], 384, 384, 24
    $region5: #{tpu_custom_call.1} parent=1 // pred_fallthru
      _
    // Predicated region
    $region6: #{tpu_custom_call.1} parent=1 // pred_check
      _
    $region7: #{tpu_custom_call.1} parent=1 // pred_check_branch
      %24 = sbr.rel (0) target = $region9
    $region8: #{tpu_custom_call.1} parent=1 // pred_region
      %s26 = ssub.s32 12288, 12288
      %27 = vsyncadd [#allocation6], %s26
      %s28 = sshll.u32 [#allocation5], 4
      %s29 = int_to_ptr.vmem [resolvable:$true] %s28
      %34 = dma.hbm_to_vmem [thread:$0]  %s1, 12288, %s29, [#allocation6], 256, 256, 16
    $region9: #{tpu_custom_call.1} parent=1 // pred_fallthru
      _
    // Predicated region
    $region10: #{tpu_custom_call.1} parent=1 // pred_check
      _
    $region11: #{tpu_custom_call.1} parent=1 // pred_check_branch
      %36 = sbr.rel (0) target = $region13
    $region12: #{tpu_custom_call.1} parent=1 // pred_region
      _
    $region13: #{tpu_custom_call.1} parent=1 // pred_fallthru
      _
    // Predicated region
    $region14: #{tpu_custom_call.1} parent=1 // pred_check
      _
    $region15: #{tpu_custom_call.1} parent=1 // pred_check_branch
      %38 = sbr.rel (0) target = $region17
    $region16: #{tpu_custom_call.1} parent=1 // pred_region
      %39 = dma.done [#allocation3], 6144
    $region17: #{tpu_custom_call.1} parent=1 // pred_fallthru
      _
    // Predicated region
    $region18: #{tpu_custom_call.1} parent=1 // pred_check
      _
    $region19: #{tpu_custom_call.1} parent=1 // pred_check_branch
      %41 = sbr.rel (0) target = $region21
    $region20: #{tpu_custom_call.1} parent=1 // pred_region
      %42 = dma.done [#allocation6], 12288
    $region21: #{tpu_custom_call.1} parent=1 // pred_fallthru
      _
    %v43 = vld [vmem:[#allocation2] sm:$0xff]
    %v44 = vld [vmem:[#allocation2 + $0x8] sm:$0xff]
    %v45 = vld [vmem:[#allocation2 + $0x10] sm:$0xff]
    %v46 = vld [vmem:[#allocation2 + $0x18] sm:$0xff]
    %v47 = vld [vmem:[#allocation2 + $0x20] sm:$0xff]
    %v48 = vld [vmem:[#allocation2 + $0x28] sm:$0xff]
    %v49 = vld [vmem:[#allocation2 + $0x30] sm:$0xff]
    %v50 = vld [vmem:[#allocation2 + $0x38] sm:$0xff]
    %v51 = vld [vmem:[#allocation2 + $0x40] sm:$0xff]
    %v52 = vld [vmem:[#allocation2 + $0x48] sm:$0xff]
    %v53 = vld [vmem:[#allocation2 + $0x50] sm:$0xff]
    %v54 = vld [vmem:[#allocation2 + $0x58] sm:$0xff]
    %v55 = vld [vmem:[#allocation2 + $0x60] sm:$0xff]
    %v56 = vld [vmem:[#allocation2 + $0x68] sm:$0xff]
    %v57 = vld [vmem:[#allocation2 + $0x70] sm:$0xff]
    %v58 = vld [vmem:[#allocation2 + $0x78] sm:$0xff]
    %v59 = vld [vmem:[#allocation2 + $0x80] sm:$0xff]
    %v60 = vld [vmem:[#allocation2 + $0x88] sm:$0xff]
    %v61 = vld [vmem:[#allocation2 + $0x90] sm:$0xff]
    %v62 = vld [vmem:[#allocation2 + $0x98] sm:$0xff]
    %v63 = vld [vmem:[#allocation2 + $0xa0] sm:$0xff]
    %v64 = vld [vmem:[#allocation2 + $0xa8] sm:$0xff]
    %v65 = vld [vmem:[#allocation2 + $0xb0] sm:$0xff]
    %v66 = vld [vmem:[#allocation2 + $0xb8] sm:$0xff]
    %v67 = vld [vmem:[#allocation2 + $0xc0] sm:$0xff]
    %v68 = vld [vmem:[#allocation2 + $0xc8] sm:$0xff]
    %v69 = vld [vmem:[#allocation2 + $0xd0] sm:$0xff]
    %v70 = vld [vmem:[#allocation2 + $0xd8] sm:$0xff]
    %v71 = vld [vmem:[#allocation2 + $0xe0] sm:$0xff]
    %v72 = vld [vmem:[#allocation2 + $0xe8] sm:$0xff]
    %v73 = vld [vmem:[#allocation2 + $0xf0] sm:$0xff]
    %v74 = vld [vmem:[#allocation2 + $0xf8] sm:$0xff]
    %v75 = vld [vmem:[#allocation2 + $0x100] sm:$0xff]
    %v76 = vld [vmem:[#allocation2 + $0x108] sm:$0xff]
    %v77 = vld [vmem:[#allocation2 + $0x110] sm:$0xff]
    %v78 = vld [vmem:[#allocation2 + $0x118] sm:$0xff]
    %v79 = vld [vmem:[#allocation2 + $0x120] sm:$0xff]
    %v80 = vld [vmem:[#allocation2 + $0x128] sm:$0xff]
    %v81 = vld [vmem:[#allocation2 + $0x130] sm:$0xff]
    %v82 = vld [vmem:[#allocation2 + $0x138] sm:$0xff]
    %v83 = vld [vmem:[#allocation2 + $0x140] sm:$0xff]
    %v84 = vld [vmem:[#allocation2 + $0x148] sm:$0xff]
    %v85 = vld [vmem:[#allocation2 + $0x150] sm:$0xff]
    %v86 = vld [vmem:[#allocation2 + $0x158] sm:$0xff]
    %v87 = vld [vmem:[#allocation2 + $0x160] sm:$0xff]
    %v88 = vld [vmem:[#allocation2 + $0x168] sm:$0xff]
    %v89 = vld [vmem:[#allocation2 + $0x170] sm:$0xff]
    %v90 = vld [vmem:[#allocation2 + $0x178] sm:$0xff]
    %v91 = vld [vmem:[#allocation5] sm:$0xff]
    %v92 = vld [vmem:[#allocation5 + $0x8] sm:$0xff]
    %v93 = vld [vmem:[#allocation5 + $0x10] sm:$0xff]
    %v94 = vld [vmem:[#allocation5 + $0x18] sm:$0xff]
    %v95 = vld [vmem:[#allocation5 + $0x20] sm:$0xff]
    %v96 = vld [vmem:[#allocation5 + $0x28] sm:$0xff]
    %v97 = vld [vmem:[#allocation5 + $0x30] sm:$0xff]
    %v98 = vld [vmem:[#allocation5 + $0x38] sm:$0xff]
    %v99 = vld [vmem:[#allocation5 + $0x40] sm:$0xff]
    %v100 = vld [vmem:[#allocation5 + $0x48] sm:$0xff]
    %v101 = vld [vmem:[#allocation5 + $0x50] sm:$0xff]
    %v102 = vld [vmem:[#allocation5 + $0x58] sm:$0xff]
    %v103 = vld [vmem:[#allocation5 + $0x60] sm:$0xff]
    %v104 = vld [vmem:[#allocation5 + $0x68] sm:$0xff]
    %v105 = vld [vmem:[#allocation5 + $0x70] sm:$0xff]
    %v106 = vld [vmem:[#allocation5 + $0x78] sm:$0xff]
    %v107 = vld [vmem:[#allocation5 + $0x80] sm:$0xff]
    %v108 = vld [vmem:[#allocation5 + $0x88] sm:$0xff]
    %v109 = vld [vmem:[#allocation5 + $0x90] sm:$0xff]
    %v110 = vld [vmem:[#allocation5 + $0x98] sm:$0xff]
    %v111 = vld [vmem:[#allocation5 + $0xa0] sm:$0xff]
    %v112 = vld [vmem:[#allocation5 + $0xa8] sm:$0xff]
    %v113 = vld [vmem:[#allocation5 + $0xb0] sm:$0xff]
    %v114 = vld [vmem:[#allocation5 + $0xb8] sm:$0xff]
    %v115 = vld [vmem:[#allocation5 + $0xc0] sm:$0xff]
    %v116 = vld [vmem:[#allocation5 + $0xc8] sm:$0xff]
    %v117 = vld [vmem:[#allocation5 + $0xd0] sm:$0xff]
    %v118 = vld [vmem:[#allocation5 + $0xd8] sm:$0xff]
    %v119 = vld [vmem:[#allocation5 + $0xe0] sm:$0xff]
    %v120 = vld [vmem:[#allocation5 + $0xe8] sm:$0xff]
    %v121 = vld [vmem:[#allocation5 + $0xf0] sm:$0xff]
    %v122 = vld [vmem:[#allocation5 + $0xf8] sm:$0xff]
    %v123 = vld [vmem:[#allocation5 + $0x100] sm:$0xff]
    %v124 = vld [vmem:[#allocation5 + $0x108] sm:$0xff]
    %v125 = vld [vmem:[#allocation5 + $0x110] sm:$0xff]
    %v126 = vld [vmem:[#allocation5 + $0x118] sm:$0xff]
    %v127 = vld [vmem:[#allocation5 + $0x120] sm:$0xff]
    %v128 = vld [vmem:[#allocation5 + $0x128] sm:$0xff]
    %v129 = vld [vmem:[#allocation5 + $0x130] sm:$0xff]
    %v130 = vld [vmem:[#allocation5 + $0x138] sm:$0xff]
    %v131 = vld [vmem:[#allocation5 + $0x140] sm:$0xff]
    %v132 = vld [vmem:[#allocation5 + $0x148] sm:$0xff]
    %v133 = vld [vmem:[#allocation5 + $0x150] sm:$0xff]
    %v134 = vld [vmem:[#allocation5 + $0x158] sm:$0xff]
    %v135 = vld [vmem:[#allocation5 + $0x160] sm:$0xff]
    %v136 = vld [vmem:[#allocation5 + $0x168] sm:$0xff]
    %v137 = vld [vmem:[#allocation5 + $0x170] sm:$0xff]
    %v138 = vld [vmem:[#allocation5 + $0x178] sm:$0xff]
    %v139 = vld [vmem:[#allocation5 + $0x180] sm:$0xff]
    %v140 = vld [vmem:[#allocation5 + $0x188] sm:$0xff]
    %v141 = vld [vmem:[#allocation5 + $0x190] sm:$0xff]
    %v142 = vld [vmem:[#allocation5 + $0x198] sm:$0xff]
    %v143 = vld [vmem:[#allocation5 + $0x1a0] sm:$0xff]
    %v144 = vld [vmem:[#allocation5 + $0x1a8] sm:$0xff]
    %v145 = vld [vmem:[#allocation5 + $0x1b0] sm:$0xff]
    %v146 = vld [vmem:[#allocation5 + $0x1b8] sm:$0xff]
    %v147 = vld [vmem:[#allocation5 + $0x1c0] sm:$0xff]
    %v148 = vld [vmem:[#allocation5 + $0x1c8] sm:$0xff]
    %v149 = vld [vmem:[#allocation5 + $0x1d0] sm:$0xff]
    %v150 = vld [vmem:[#allocation5 + $0x1d8] sm:$0xff]
    %v151 = vld [vmem:[#allocation5 + $0x1e0] sm:$0xff]
    %v152 = vld [vmem:[#allocation5 + $0x1e8] sm:$0xff]
    %v153 = vld [vmem:[#allocation5 + $0x1f0] sm:$0xff]
    %v154 = vld [vmem:[#allocation5 + $0x1f8] sm:$0xff]
    %v155 = vld [vmem:[#allocation5 + $0x200] sm:$0xff]
    %v156 = vld [vmem:[#allocation5 + $0x208] sm:$0xff]
    %v157 = vld [vmem:[#allocation5 + $0x210] sm:$0xff]
    %v158 = vld [vmem:[#allocation5 + $0x218] sm:$0xff]
    %v159 = vld [vmem:[#allocation5 + $0x220] sm:$0xff]
    %v160 = vld [vmem:[#allocation5 + $0x228] sm:$0xff]
    %v161 = vld [vmem:[#allocation5 + $0x230] sm:$0xff]
    %v162 = vld [vmem:[#allocation5 + $0x238] sm:$0xff]
    %v163 = vld [vmem:[#allocation5 + $0x240] sm:$0xff]
    %v164 = vld [vmem:[#allocation5 + $0x248] sm:$0xff]
    %v165 = vld [vmem:[#allocation5 + $0x250] sm:$0xff]
    %v166 = vld [vmem:[#allocation5 + $0x258] sm:$0xff]
    %v167 = vld [vmem:[#allocation5 + $0x260] sm:$0xff]
    %v168 = vld [vmem:[#allocation5 + $0x268] sm:$0xff]
    %v169 = vld [vmem:[#allocation5 + $0x270] sm:$0xff]
    %v170 = vld [vmem:[#allocation5 + $0x278] sm:$0xff]
    %v171 = vld [vmem:[#allocation5 + $0x280] sm:$0xff]
    %v172 = vld [vmem:[#allocation5 + $0x288] sm:$0xff]
    %v173 = vld [vmem:[#allocation5 + $0x290] sm:$0xff]
    %v174 = vld [vmem:[#allocation5 + $0x298] sm:$0xff]
    %v175 = vld [vmem:[#allocation5 + $0x2a0] sm:$0xff]
    %v176 = vld [vmem:[#allocation5 + $0x2a8] sm:$0xff]
    %v177 = vld [vmem:[#allocation5 + $0x2b0] sm:$0xff]
    %v178 = vld [vmem:[#allocation5 + $0x2b8] sm:$0xff]
    %v179 = vld [vmem:[#allocation5 + $0x2c0] sm:$0xff]
    %v180 = vld [vmem:[#allocation5 + $0x2c8] sm:$0xff]
    %v181 = vld [vmem:[#allocation5 + $0x2d0] sm:$0xff]
    %v182 = vld [vmem:[#allocation5 + $0x2d8] sm:$0xff]
    %v183 = vld [vmem:[#allocation5 + $0x2e0] sm:$0xff]
    %v184 = vld [vmem:[#allocation5 + $0x2e8] sm:$0xff]
    %v185 = vld [vmem:[#allocation5 + $0x2f0] sm:$0xff]
    %v186 = vld [vmem:[#allocation5 + $0x2f8] sm:$0xff]
    %v187 = vld [vmem:[%s2] sm:$0x3]
    %v189 = vlaneseq
    %v190 = vshrl.u32 %v189, 7
    %v191 = vsub.s32 0, %v190
    %v192 = vrot.slane %v187, %v191
    %v193 = vlaneseq
    %v194 = vshrl.u32 %v193, 7
    %v195 = vsub.s32 1, %v194
    %v196 = vrot.slane %v187, %v195
    %199 = vmatprep.subr.mxu0 %v92
    %200 = vmatpush1.msra.mxu0 %v91
    %201 = vmatprep.subr.mxu0 %v94
    %202 = vmatpush1.msra.mxu0 %v93
    %203 = vmatprep.subr.mxu0 %v96
    %204 = vmatpush1.msra.mxu0 %v95
    %205 = vmatprep.subr.mxu0 %v98
    %206 = vmatpush1.msra.mxu0 %v97
    %207 = vmatprep.subr.mxu0 %v100
    %208 = vmatpush1.msra.mxu0 %v99
    %209 = vmatprep.subr.mxu0 %v102
    %210 = vmatpush1.msra.mxu0 %v101
    %211 = vmatprep.subr.mxu0 %v104
    %212 = vmatpush1.msra.mxu0 %v103
    %213 = vmatprep.subr.mxu0 %v106
    %214 = vmatpush1.msra.mxu0 %v105
    %215 = vmatprep.subr.mxu0 %v108
    %216 = vmatpush1.msra.mxu0 %v107
    %217 = vmatprep.subr.mxu0 %v110
    %218 = vmatpush1.msra.mxu0 %v109
    %219 = vmatprep.subr.mxu0 %v112
    %220 = vmatpush1.msra.mxu0 %v111
    %221 = vmatprep.subr.mxu0 %v114
    %222 = vmatpush1.msra.mxu0 %v113
    %223 = vmatprep.subr.mxu0 %v116
    %224 = vmatpush1.msra.mxu0 %v115
    %225 = vmatprep.subr.mxu0 %v118
    %226 = vmatpush1.msra.mxu0 %v117
    %227 = vmatprep.subr.mxu0 %v120
    %228 = vmatpush1.msra.mxu0 %v119
    %229 = vmatprep.subr.mxu0 %v122
    %230 = vmatpush1.msra.mxu0 %v121
    %231 = vmatprep.subr.mxu0 %v124
    %232 = vmatpush1.msra.mxu0 %v123
    %233 = vmatprep.subr.mxu0 %v126
    %234 = vmatpush1.msra.mxu0 %v125
    %235 = vmatprep.subr.mxu0 %v128
    %236 = vmatpush1.msra.mxu0 %v127
    %237 = vmatprep.subr.mxu0 %v130
    %238 = vmatpush1.msra.mxu0 %v129
    %239 = vmatprep.subr.mxu0 %v132
    %240 = vmatpush1.msra.mxu0 %v131
    %241 = vmatprep.subr.mxu0 %v134
    %242 = vmatpush1.msra.mxu0 %v133
    %243 = vmatprep.subr.mxu0 %v136
    %244 = vmatpush1.msra.mxu0 %v135
    %245 = vmatprep.subr.mxu0 %v138
    %246 = vmatpush1.msra.mxu0 %v137
    %247 = vmatprep.subr.mxu0 %v140
    %248 = vmatpush1.msra.mxu0 %v139
    %249 = vmatprep.subr.mxu0 %v142
    %250 = vmatpush1.msra.mxu0 %v141
    %251 = vmatprep.subr.mxu0 %v144
    %252 = vmatpush1.msra.mxu0 %v143
    %253 = vmatprep.subr.mxu0 %v146
    %254 = vmatpush1.msra.mxu0 %v145
    %255 = vmatprep.subr.mxu0 %v148
    %256 = vmatpush1.msra.mxu0 %v147
    %257 = vmatprep.subr.mxu0 %v150
    %258 = vmatpush1.msra.mxu0 %v149
    %259 = vmatprep.subr.mxu0 %v152
    %260 = vmatpush1.msra.mxu0 %v151
    %261 = vmatprep.subr.mxu0 %v154
    %262 = vmatpush1.msra.mxu0 %v153
    %263 = vmatprep.mubr.f32.mxu0 %v44
    %264 = vmatmul.mubr.f32.gmra.mrb[0].mxu0 %v43
    %v265 = vpop.f32.mrb[0].mxu0
    %v266 = vadd.f32 %v192, %v265
    %v267 = vpop.f32.mrb[0].mxu0
    %v268 = vadd.f32 %v196, %v267
    %269 = vmatprep.mubr.f32.mxu0 %v47
    %270 = vmatmul.mubr.f32.gmra.mrb[0].mxu0 %v46
    %v271 = vpop.f32.mrb[0].mxu0
    %v272 = vadd.f32 %v192, %v271
    %v273 = vpop.f32.mrb[0].mxu0
    %v274 = vadd.f32 %v196, %v273
    %275 = vmatprep.mubr.f32.mxu0 %v50
    %276 = vmatmul.mubr.f32.gmra.mrb[0].mxu0 %v49
    %v277 = vpop.f32.mrb[0].mxu0
    %v278 = vadd.f32 %v192, %v277
    %v279 = vpop.f32.mrb[0].mxu0
    %v280 = vadd.f32 %v196, %v279
    %281 = vmatprep.mubr.f32.mxu0 %v53
    %282 = vmatmul.mubr.f32.gmra.mrb[0].mxu0 %v52
    %v283 = vpop.f32.mrb[0].mxu0
    %v284 = vadd.f32 %v192, %v283
    %v285 = vpop.f32.mrb[0].mxu0
    %v286 = vadd.f32 %v196, %v285
    %287 = vmatprep.mubr.f32.mxu0 %v56
    %288 = vmatmul.mubr.f32.gmra.mrb[0].mxu0 %v55
    %v289 = vpop.f32.mrb[0].mxu0
    %v290 = vadd.f32 %v192, %v289
    %v291 = vpop.f32.mrb[0].mxu0
    %v292 = vadd.f32 %v196, %v291
    %293 = vmatprep.mubr.f32.mxu0 %v59
    %294 = vmatmul.mubr.f32.gmra.mrb[0].mxu0 %v58
    %v295 = vpop.f32.mrb[0].mxu0
    %v296 = vadd.f32 %v192, %v295
    %v297 = vpop.f32.mrb[0].mxu0
    %v298 = vadd.f32 %v196, %v297
    %299 = vmatprep.mubr.f32.mxu0 %v62
    %300 = vmatmul.mubr.f32.gmra.mrb[0].mxu0 %v61
    %v301 = vpop.f32.mrb[0].mxu0
    %v302 = vadd.f32 %v192, %v301
    %v303 = vpop.f32.mrb[0].mxu0
    %v304 = vadd.f32 %v196, %v303
    %305 = vmatprep.mubr.f32.mxu0 %v65
    %306 = vmatmul.mubr.f32.gmra.mrb[0].mxu0 %v64
    %v307 = vpop.f32.mrb[0].mxu0
    %v308 = vadd.f32 %v192, %v307
    %v309 = vpop.f32.mrb[0].mxu0
    %v310 = vadd.f32 %v196, %v309
    %311 = vmatprep.mubr.f32.mxu0 %v68
    %312 = vmatmul.mubr.f32.gmra.mrb[0].mxu0 %v67
    %v313 = vpop.f32.mrb[0].mxu0
    %v314 = vadd.f32 %v192, %v313
    %v315 = vpop.f32.mrb[0].mxu0
    %v316 = vadd.f32 %v196, %v315
    %317 = vmatprep.mubr.f32.mxu0 %v71
    %318 = vmatmul.mubr.f32.gmra.mrb[0].mxu0 %v70
    %v319 = vpop.f32.mrb[0].mxu0
    %v320 = vadd.f32 %v192, %v319
    %v321 = vpop.f32.mrb[0].mxu0
    %v322 = vadd.f32 %v196, %v321
    %323 = vmatprep.mubr.f32.mxu0 %v74
    %324 = vmatmul.mubr.f32.gmra.mrb[0].mxu0 %v73
    %v325 = vpop.f32.mrb[0].mxu0
    %v326 = vadd.f32 %v192, %v325
    %v327 = vpop.f32.mrb[0].mxu0
    %v328 = vadd.f32 %v196, %v327
    %329 = vmatprep.mubr.f32.mxu0 %v77
    %330 = vmatmul.mubr.f32.gmra.mrb[0].mxu0 %v76
    %v331 = vpop.f32.mrb[0].mxu0
    %v332 = vadd.f32 %v192, %v331
    %v333 = vpop.f32.mrb[0].mxu0
    %v334 = vadd.f32 %v196, %v333
    %335 = vmatprep.mubr.f32.mxu0 %v80
    %336 = vmatmul.mubr.f32.gmra.mrb[0].mxu0 %v79
    %v337 = vpop.f32.mrb[0].mxu0
    %v338 = vadd.f32 %v192, %v337
    %v339 = vpop.f32.mrb[0].mxu0
    %v340 = vadd.f32 %v196, %v339
    %341 = vmatprep.mubr.f32.mxu0 %v83
    %342 = vmatmul.mubr.f32.gmra.mrb[0].mxu0 %v82
    %v343 = vpop.f32.mrb[0].mxu0
    %v344 = vadd.f32 %v192, %v343
    %v345 = vpop.f32.mrb[0].mxu0
    %v346 = vadd.f32 %v196, %v345
    %347 = vmatprep.mubr.f32.mxu0 %v86
    %348 = vmatmul.mubr.f32.gmra.mrb[0].mxu0 %v85
    %v349 = vpop.f32.mrb[0].mxu0
    %v350 = vadd.f32 %v192, %v349
    %v351 = vpop.f32.mrb[0].mxu0
    %v352 = vadd.f32 %v196, %v351
    %353 = vmatprep.mubr.f32.mxu0 %v89
    %354 = vmatmul.mubr.f32.gmra.mrb[0].mxu0 %v88
    %v355 = vpop.f32.mrb[0].mxu0
    %v356 = vadd.f32 %v192, %v355
    %v357 = vpop.f32.mrb[0].mxu0
    %v358 = vadd.f32 %v196, %v357
    %359 = vdwg.mxu0
    %360 = vmatprep.subr.mxu0 %v156
    %361 = vmatpush1.msra.mxu0 %v155
    %362 = vmatprep.subr.mxu0 %v158
    %363 = vmatpush1.msra.mxu0 %v157
    %364 = vmatprep.subr.mxu0 %v160
    %365 = vmatpush1.msra.mxu0 %v159
    %366 = vmatprep.subr.mxu0 %v162
    %367 = vmatpush1.msra.mxu0 %v161
    %368 = vmatprep.subr.mxu0 %v164
    %369 = vmatpush1.msra.mxu0 %v163
    %370 = vmatprep.subr.mxu0 %v166
    %371 = vmatpush1.msra.mxu0 %v165
    %372 = vmatprep.subr.mxu0 %v168
    %373 = vmatpush1.msra.mxu0 %v167
    %374 = vmatprep.subr.mxu0 %v170
    %375 = vmatpush1.msra.mxu0 %v169
    %376 = vmatprep.subr.mxu0 %v172
    %377 = vmatpush1.msra.mxu0 %v171
    %378 = vmatprep.subr.mxu0 %v174
    %379 = vmatpush1.msra.mxu0 %v173
    %380 = vmatprep.subr.mxu0 %v176
    %381 = vmatpush1.msra.mxu0 %v175
    %382 = vmatprep.subr.mxu0 %v178
    %383 = vmatpush1.msra.mxu0 %v177
    %384 = vmatprep.subr.mxu0 %v180
    %385 = vmatpush1.msra.mxu0 %v179
    %386 = vmatprep.subr.mxu0 %v182
    %387 = vmatpush1.msra.mxu0 %v181
    %388 = vmatprep.subr.mxu0 %v184
    %389 = vmatpush1.msra.mxu0 %v183
    %390 = vmatprep.subr.mxu0 %v186
    %391 = vmatpush1.msra.mxu0 %v185
    %392 = vmatprep.subr.mxu0 0.0
    %393 = vmatpush1.msra.mxu0 0.0
    %394 = vmatprep.subr.mxu0 0.0
    %395 = vmatpush1.msra.mxu0 0.0
    %396 = vmatprep.subr.mxu0 0.0
    %397 = vmatpush1.msra.mxu0 0.0
    %398 = vmatprep.subr.mxu0 0.0
    %399 = vmatpush1.msra.mxu0 0.0
    %400 = vmatprep.subr.mxu0 0.0
    %401 = vmatpush1.msra.mxu0 0.0
    %402 = vmatprep.subr.mxu0 0.0
    %403 = vmatpush1.msra.mxu0 0.0
    %404 = vmatprep.subr.mxu0 0.0
    %405 = vmatpush1.msra.mxu0 0.0
    %406 = vmatprep.subr.mxu0 0.0
    %407 = vmatpush1.msra.mxu0 0.0
    %408 = vmatprep.subr.mxu0 0.0
    %409 = vmatpush1.msra.mxu0 0.0
    %410 = vmatprep.subr.mxu0 0.0
    %411 = vmatpush1.msra.mxu0 0.0
    %412 = vmatprep.subr.mxu0 0.0
    %413 = vmatpush1.msra.mxu0 0.0
    %414 = vmatprep.subr.mxu0 0.0
    %415 = vmatpush1.msra.mxu0 0.0
    %416 = vmatprep.subr.mxu0 0.0
    %417 = vmatpush1.msra.mxu0 0.0
    %418 = vmatprep.subr.mxu0 0.0
    %419 = vmatpush1.msra.mxu0 0.0
    %420 = vmatprep.subr.mxu0 0.0
    %421 = vmatpush1.msra.mxu0 0.0
    %422 = vmatprep.subr.mxu0 0.0
    %423 = vmatpush1.msra.mxu0 0.0
    %424 = vmatprep.mubr.f32.mxu0 0.0
    %425 = vmatmul.mubr.f32.gmra.mrb[0].mxu0 %v45
    %v426 = vpop.f32.mrb[0].mxu0
    %v427 = vadd.f32 %v266, %v426
    %v428 = vpop.f32.mrb[0].mxu0
    %v429 = vadd.f32 %v268, %v428
    %430 = vmatprep.mubr.f32.mxu0 0.0
    %431 = vmatmul.mubr.f32.gmra.mrb[0].mxu0 %v48
    %v432 = vpop.f32.mrb[0].mxu0
    %v433 = vadd.f32 %v272, %v432
    %v434 = vpop.f32.mrb[0].mxu0
    %v435 = vadd.f32 %v274, %v434
    %436 = vmatprep.mubr.f32.mxu0 0.0
    %437 = vmatmul.mubr.f32.gmra.mrb[0].mxu0 %v51
    %v438 = vpop.f32.mrb[0].mxu0
    %v439 = vadd.f32 %v278, %v438
    %v440 = vpop.f32.mrb[0].mxu0
    %v441 = vadd.f32 %v280, %v440
    %442 = vmatprep.mubr.f32.mxu0 0.0
    %443 = vmatmul.mubr.f32.gmra.mrb[0].mxu0 %v54
    %v444 = vpop.f32.mrb[0].mxu0
    %v445 = vadd.f32 %v284, %v444
    %v446 = vpop.f32.mrb[0].mxu0
    %v447 = vadd.f32 %v286, %v446
    %448 = vmatprep.mubr.f32.mxu0 0.0
    %449 = vmatmul.mubr.f32.gmra.mrb[0].mxu0 %v57
    %v450 = vpop.f32.mrb[0].mxu0
    %v451 = vadd.f32 %v290, %v450
    %v452 = vpop.f32.mrb[0].mxu0
    %v453 = vadd.f32 %v292, %v452
    %454 = vmatprep.mubr.f32.mxu0 0.0
    %455 = vmatmul.mubr.f32.gmra.mrb[0].mxu0 %v60
    %v456 = vpop.f32.mrb[0].mxu0
    %v457 = vadd.f32 %v296, %v456
    %v458 = vpop.f32.mrb[0].mxu0
    %v459 = vadd.f32 %v298, %v458
    %460 = vmatprep.mubr.f32.mxu0 0.0
    %461 = vmatmul.mubr.f32.gmra.mrb[0].mxu0 %v63
    %v462 = vpop.f32.mrb[0].mxu0
    %v463 = vadd.f32 %v302, %v462
    %v464 = vpop.f32.mrb[0].mxu0
    %v465 = vadd.f32 %v304, %v464
    %466 = vmatprep.mubr.f32.mxu0 0.0
    %467 = vmatmul.mubr.f32.gmra.mrb[0].mxu0 %v66
    %v468 = vpop.f32.mrb[0].mxu0
    %v469 = vadd.f32 %v308, %v468
    %v470 = vpop.f32.mrb[0].mxu0
    %v471 = vadd.f32 %v310, %v470
    %472 = vmatprep.mubr.f32.mxu0 0.0
    %473 = vmatmul.mubr.f32.gmra.mrb[0].mxu0 %v69
    %v474 = vpop.f32.mrb[0].mxu0
    %v475 = vadd.f32 %v314, %v474
    %v476 = vpop.f32.mrb[0].mxu0
    %v477 = vadd.f32 %v316, %v476
    %478 = vmatprep.mubr.f32.mxu0 0.0
    %479 = vmatmul.mubr.f32.gmra.mrb[0].mxu0 %v72
    %v480 = vpop.f32.mrb[0].mxu0
    %v481 = vadd.f32 %v320, %v480
    %v482 = vpop.f32.mrb[0].mxu0
    %v483 = vadd.f32 %v322, %v482
    %484 = vmatprep.mubr.f32.mxu0 0.0
    %485 = vmatmul.mubr.f32.gmra.mrb[0].mxu0 %v75
    %v486 = vpop.f32.mrb[0].mxu0
    %v487 = vadd.f32 %v326, %v486
    %v488 = vpop.f32.mrb[0].mxu0
    %v489 = vadd.f32 %v328, %v488
    %490 = vmatprep.mubr.f32.mxu0 0.0
    %491 = vmatmul.mubr.f32.gmra.mrb[0].mxu0 %v78
    %v492 = vpop.f32.mrb[0].mxu0
    %v493 = vadd.f32 %v332, %v492
    %v494 = vpop.f32.mrb[0].mxu0
    %v495 = vadd.f32 %v334, %v494
    %496 = vmatprep.mubr.f32.mxu0 0.0
    %497 = vmatmul.mubr.f32.gmra.mrb[0].mxu0 %v81
    %v498 = vpop.f32.mrb[0].mxu0
    %v499 = vadd.f32 %v338, %v498
    %v500 = vpop.f32.mrb[0].mxu0
    %v501 = vadd.f32 %v340, %v500
    %502 = vmatprep.mubr.f32.mxu0 0.0
    %503 = vmatmul.mubr.f32.gmra.mrb[0].mxu0 %v84
    %v504 = vpop.f32.mrb[0].mxu0
    %v505 = vadd.f32 %v344, %v504
    %v506 = vpop.f32.mrb[0].mxu0
    %v507 = vadd.f32 %v346, %v506
    %508 = vmatprep.mubr.f32.mxu0 0.0
    %509 = vmatmul.mubr.f32.gmra.mrb[0].mxu0 %v87
    %v510 = vpop.f32.mrb[0].mxu0
    %v511 = vadd.f32 %v350, %v510
    %v512 = vpop.f32.mrb[0].mxu0
    %v513 = vadd.f32 %v352, %v512
    %514 = vmatprep.mubr.f32.mxu0 0.0
    %515 = vmatmul.mubr.f32.gmra.mrb[0].mxu0 %v90
    %v516 = vpop.f32.mrb[0].mxu0
    %v517 = vadd.f32 %v356, %v516
    %v518 = vpop.f32.mrb[0].mxu0
    %v519 = vadd.f32 %v358, %v518
    %520 = vdwg.mxu0
    %521 = vst [vmem:[#allocation7] sm:$0xff] %v427
    %522 = vst [vmem:[#allocation7 + $0x8] sm:$0xff] %v429
    %523 = vst [vmem:[#allocation7 + $0x10] sm:$0xff] %v433
    %524 = vst [vmem:[#allocation7 + $0x18] sm:$0xff] %v435
    %525 = vst [vmem:[#allocation7 + $0x20] sm:$0xff] %v439
    %526 = vst [vmem:[#allocation7 + $0x28] sm:$0xff] %v441
    %527 = vst [vmem:[#allocation7 + $0x30] sm:$0xff] %v445
    %528 = vst [vmem:[#allocation7 + $0x38] sm:$0xff] %v447
    %529 = vst [vmem:[#allocation7 + $0x40] sm:$0xff] %v451
    %530 = vst [vmem:[#allocation7 + $0x48] sm:$0xff] %v453
    %531 = vst [vmem:[#allocation7 + $0x50] sm:$0xff] %v457
    %532 = vst [vmem:[#allocation7 + $0x58] sm:$0xff] %v459
    %533 = vst [vmem:[#allocation7 + $0x60] sm:$0xff] %v463
    %534 = vst [vmem:[#allocation7 + $0x68] sm:$0xff] %v465
    %535 = vst [vmem:[#allocation7 + $0x70] sm:$0xff] %v469
    %536 = vst [vmem:[#allocation7 + $0x78] sm:$0xff] %v471
    %537 = vst [vmem:[#allocation7 + $0x80] sm:$0xff] %v475
    %538 = vst [vmem:[#allocation7 + $0x88] sm:$0xff] %v477
    %539 = vst [vmem:[#allocation7 + $0x90] sm:$0xff] %v481
    %540 = vst [vmem:[#allocation7 + $0x98] sm:$0xff] %v483
    %541 = vst [vmem:[#allocation7 + $0xa0] sm:$0xff] %v487
    %542 = vst [vmem:[#allocation7 + $0xa8] sm:$0xff] %v489
    %543 = vst [vmem:[#allocation7 + $0xb0] sm:$0xff] %v493
    %544 = vst [vmem:[#allocation7 + $0xb8] sm:$0xff] %v495
    %545 = vst [vmem:[#allocation7 + $0xc0] sm:$0xff] %v499
    %546 = vst [vmem:[#allocation7 + $0xc8] sm:$0xff] %v501
    %547 = vst [vmem:[#allocation7 + $0xd0] sm:$0xff] %v505
    %548 = vst [vmem:[#allocation7 + $0xd8] sm:$0xff] %v507
    %549 = vst [vmem:[#allocation7 + $0xe0] sm:$0xff] %v511
    %550 = vst [vmem:[#allocation7 + $0xe8] sm:$0xff] %v513
    %551 = vst [vmem:[#allocation7 + $0xf0] sm:$0xff] %v517
    %552 = vst [vmem:[#allocation7 + $0xf8] sm:$0xff] %v519
    // Predicated region
    $region22: #{tpu_custom_call.1} parent=1 // pred_check
      _
    $region23: #{tpu_custom_call.1} parent=1 // pred_check_branch
      %554 = sbr.rel (0) target = $region25
    $region24: #{tpu_custom_call.1} parent=1 // pred_region
      %s556 = ssub.s32 4096, 4096
      %557 = vsyncadd [#allocation4], %s556
      %s558 = sshll.u32 [#allocation7], 4
      %s559 = int_to_ptr.vmem [resolvable:$true] %s558
      %564 = dma.vmem_to_hbm [thread:$0]  %s559, 4096, %s3, [#allocation4], 256, 256, 16
    $region25: #{tpu_custom_call.1} parent=1 // pred_fallthru
      _
    // Predicated region
    $region26: #{tpu_custom_call.1} parent=1 // pred_check
      _
    $region27: #{tpu_custom_call.1} parent=1 // pred_check_branch
      %566 = sbr.rel (0) target = $region29
    $region28: #{tpu_custom_call.1} parent=1 // pred_region
      %567 = dma.done [#allocation4], 4096
    $region29: #{tpu_custom_call.1} parent=1 // pred_fallthru
      _
    %568 = vsyncpa [#allocation3], 1
    %569 = vsyncpa [#allocation6], 1
    %570 = vsyncpa [#allocation4], 1

</llo_original>
